<compile_context>
chip_gen: v6e
topology: v6e:2x2x1
jax: 0.10.0
libtpu: 0.0.40
codegen_flags: <defaults>
</compile_context>

<pallas_src>
import jax
import jax.numpy as jnp
from jax.experimental import pallas as pl
from jax.experimental.pallas import tpu as pltpu

EPS = 1e-5  # PyTorch nn.InstanceNorm2d default eps

# Number of pipeline buffers for the big x input block.  2 = Pallas default
# (double-buffering).  3 (pl.Buffered(3)) is a sweep candidate to hide DMA
# issue jitter once the grid has >= 8 steps; it is counted in the VMEM budget
# below so flipping it on is safe.
_X_INPUT_BUFFERS = 2

# Reserve for everything that is not a pipelined (TC, HW) I/O buffer:
# gamma/beta blocks, chunk-sized f32 intermediates, compiler scratch.
_SCRATCH_OVERHEAD_BYTES = 1 << 20

# Target f32 working-set per lane-chunk (~32 vregs) so the per-chunk
# intermediates stay (mostly) vreg-resident instead of becoming a full-tile
# f32 copy in compiler-managed VMEM scratch.
_CHUNK_F32_BYTES = 128 * 1024


# ---------------------------------------------------------------------------
# Generation-aware VMEM plan.
#   v7x : 64 MiB/TC  -> budget 24 MiB, vmem_limit 32 MiB
#   v6e : 128 MiB    -> budget 48 MiB, vmem_limit 64 MiB
#   v5e : 128 MiB    -> budget 48 MiB, vmem_limit 64 MiB
# ---------------------------------------------------------------------------
def _vmem_plan():
    try:
        cap = int(pltpu.get_tpu_info().vmem_capacity_bytes)
    except Exception:
        cap = 64 * 1024 * 1024  # conservative (v7x-sized) fallback
    budget = (cap * 3) // 8
    limit = cap // 2
    return cap, budget, limit


# ---------------------------------------------------------------------------
# Channel-tile picker.
# Legal TC: divides C exactly and is a multiple of 8 (or equals C), per the
# (8,128) block rule on the second-to-last block dim.  Among tiles whose
# pipelined big buffers fit the budget, prefer the largest one that still
# gives >= 8 grid steps (then >= 4, >= 2, >= 1) so the DMA pipeline stays
# overlapped and the grid can be sharded across v7x's two TensorCores.
# ---------------------------------------------------------------------------
def _legal_channel_tiles(C):
    tiles = {C}
    t = 8
    while t < C:
        if C % t == 0:
            tiles.add(t)
        t += 8
    return sorted(tiles)


def _pick_channel_tile(B, C, HW, itemsize, vmem_budget_bytes, n_big_buffers,
                       min_grid_steps=8):
    legal = _legal_channel_tiles(C)
    row_bytes = HW * itemsize
    budget = max(0, vmem_budget_bytes)
    fits = [t for t in legal if n_big_buffers * t * row_bytes <= budget]
    if fits:
        steps = lambda t: B * (C // t)
        for target in (min_grid_steps, 4, 2, 1):
            good = [t for t in fits if steps(t) >= target]
            if good:
                return max(good)
    # No legal tile fits the budget (tiny / non-multiple-of-8 C at very large
    # H*W): take the smallest legal tile to minimise VMEM and let the caller
    # raise vmem_limit_bytes toward physical VMEM.
    # TODO(synk): if even the smallest legal tile exceeds physical VMEM, a
    # spatially-streamed two-pass variant (grid reduction axis accumulating
    # sum/sumsq in VMEM scratch, then a second apply pass) would be needed.
    return min(legal)


def _pick_lane_chunk(TC, HW):
    """Largest lane-chunk (multiple of 128) whose f32 slab stays ~vreg-sized."""
    max_chunk = max(128, _CHUNK_F32_BYTES // (TC * 4))
    if HW <= max_chunk:
        return HW
    return max(128, (max_chunk // 128) * 128)


# ---------------------------------------------------------------------------
# Kernel factory: fused instance norm (over the lane axis) + AdaIN affine.
#   x block     : (1, TC, HW)
#   gamma/beta  : (1, TC, 1)      Grid = (B, C // TC), both axes "parallel".
# Pass 1: chunked sum / sum-of-squares accumulated into (1, TC, 1) f32
#         carries (reviewer-suggested single-pass stats; the max(.,0) clamp
#         guards the rare E[x^2]-E[x]^2 cancellation for large-mean inputs).
# Pass 2: chunked x * scale + shift store (gamma/beta folded per channel).
# Neither pass materializes a full-tile f32 intermediate.
# ---------------------------------------------------------------------------
def _make_adain_norm_kernel(TC, HW, chunk):
    n_full = HW // chunk
    tail = HW - n_full * chunk
    inv_hw = 1.0 / float(HW)
    loop_unroll = True if n_full <= 8 else 4

    def kernel(x_ref, gamma_ref, beta_ref, o_ref):
        def chunk_stats(off, size):
            xc = x_ref[:, :, pl.ds(off, size)].astype(jnp.float32)
            return (jnp.sum(xc, axis=-1, keepdims=True),
                    jnp.sum(xc * xc, axis=-1, keepdims=True))

        def stats_body(i, carry):
            s_acc, ss_acc = carry
            off = pl.multiple_of(i * chunk, chunk)
            ds_, dss = chunk_stats(off, chunk)
            return s_acc + ds_, ss_acc + dss

        zero = jnp.zeros((1, TC, 1), jnp.float32)
        s, ss = jax.lax.fori_loop(0, n_full, stats_body, (zero, zero),
                                  unroll=loop_unroll)
        if tail:
            dt, dst = chunk_stats(n_full * chunk, tail)
            s, ss = s + dt, ss + dst

        mean = s * inv_hw
        var = jnp.maximum(ss * inv_hw - mean * mean, 0.0)  # biased variance

        # Fold gamma/beta into one per-channel scale/shift (O(C) work) so the
        # big slab only needs one mul + one add per element.
        scale = gamma_ref[...] * jax.lax.rsqrt(var + EPS)  # (1, TC, 1)
        shift = beta_ref[...] - mean * scale               # (1, TC, 1)

        def apply_chunk(off, size):
            xc = x_ref[:, :, pl.ds(off, size)].astype(jnp.float32)
            o_ref[:, :, pl.ds(off, size)] = (xc * scale + shift).astype(o_ref.dtype)

        def apply_body(i, carry):
            off = pl.multiple_of(i * chunk, chunk)
            apply_chunk(off, chunk)
            return carry

        jax.lax.fori_loop(0, n_full, apply_body, 0, unroll=loop_unroll)
        if tail:
            apply_chunk(n_full * chunk, tail)

    return kernel


# ---------------------------------------------------------------------------
# Wrapper: style MLP in plain jnp (too small for an MXU kernel), then the
# fused instance-norm + affine Pallas kernel tiled over (batch, channel-tile).
# ---------------------------------------------------------------------------
def adain_forward(x_nchw, style, params):
    B, C, H, W = x_nchw.shape
    HW = H * W

    # --- style MLP (Linear+ReLU, Linear+ReLU, Linear) -> [beta | gamma] ---
    w1, b1, w2, b2, w3, b3 = params
    s = style.reshape(B, -1).astype(jnp.float32)
    h = jnp.maximum(s @ w1 + b1, 0.0)
    h = jnp.maximum(h @ w2 + b2, 0.0)
    st = h @ w3 + b3                                         # (B, 2C)
    beta = st[:, :C].reshape(B, C, 1).astype(jnp.float32)
    gamma = st[:, C:].reshape(B, C, 1).astype(jnp.float32)

    x_flat = x_nchw.reshape(B, C, HW)                        # free reshape
    itemsize = x_nchw.dtype.itemsize

    vmem_cap, vmem_budget, vmem_limit = _vmem_plan()
    n_big = 2 + _X_INPUT_BUFFERS  # pipelined x-in buffers + double-buffered out
    TC = _pick_channel_tile(B, C, HW, itemsize,
                            vmem_budget - _SCRATCH_OVERHEAD_BYTES, n_big)
    chunk = _pick_lane_chunk(TC, HW)

    # If only the smallest legal tile was available and it still overruns the
    # default limit, grow the scoped limit toward physical VMEM (the kernel is
    # HBM-bound, so a larger limit is harmless as long as it physically fits).
    needed = n_big * TC * HW * itemsize + _SCRATCH_OVERHEAD_BYTES
    if needed > vmem_limit:
        vmem_limit = max(vmem_limit, min(int(vmem_cap * 0.9), needed + (4 << 20)))

    grid = (B, C // TC)

    cost = pl.CostEstimate(
        flops=int(7 * B * C * HW),
        transcendentals=int(B * C),
        bytes_accessed=int(2 * B * C * HW * itemsize + 2 * B * C * 4),
    )

    # NOTE: the (1, TC, 1) gamma/beta blocks are tiny strided DMAs (<0.1% of x
    # traffic); kept in this layout for lowering robustness.  The leading
    # batch-1 block dim is kept explicit (pl.Squeezed() would only save index
    # bookkeeping and this layout is proven to lower cleanly).
    x_spec_kwargs = {}
    if _X_INPUT_BUFFERS != 2:
        x_spec_kwargs["pipeline_mode"] = pl.Buffered(_X_INPUT_BUFFERS)

    out_flat = pl.pallas_call(
        _make_adain_norm_kernel(TC, HW, chunk),
        out_shape=jax.ShapeDtypeStruct((B, C, HW), x_nchw.dtype),
        grid=grid,
        in_specs=[
            pl.BlockSpec((1, TC, HW), lambda b, c: (b, c, 0), **x_spec_kwargs),
            pl.BlockSpec((1, TC, 1), lambda b, c: (b, c, 0)),
            pl.BlockSpec((1, TC, 1), lambda b, c: (b, c, 0)),
        ],
        out_specs=pl.BlockSpec((1, TC, HW), lambda b, c: (b, c, 0)),
        compiler_params=pltpu.CompilerParams(
            dimension_semantics=("parallel", "parallel"),
            vmem_limit_bytes=int(vmem_limit),
        ),
        cost_estimate=cost,
    )(x_flat, gamma, beta)
    return out_flat.reshape(B, C, H, W)


# ---------------------------------------------------------------------------
# Pure-JAX reference (mirrors the PyTorch forward) for a correctness check.
# ---------------------------------------------------------------------------
def adain_reference(x, style, params):
    w1, b1, w2, b2, w3, b3 = params
    s = style.reshape(style.shape[0], -1)
    h = jnp.maximum(s @ w1 + b1, 0.0)
    h = jnp.maximum(h @ w2 + b2, 0.0)
    s = h @ w3 + b3
    N = s.shape[1]
    beta = s[:, : N // 2][:, :, None, None]
    gamma = s[:, N // 2:][:, :, None, None]
    mean = x.mean(axis=(2, 3), keepdims=True)
    var = x.var(axis=(2, 3), keepdims=True)      # biased, like InstanceNorm2d
    xn = (x - mean) / jnp.sqrt(var + EPS)
    return xn * gamma + beta


if __name__ == "__main__":
    # Small shapes consistent with the module's forward.
    B, C, H, W = 2, 4, 16, 16                    # C == out_dim
    style_dim, dim, out_dim = 8, 32, C

    key = jax.random.PRNGKey(0)
    ks = jax.random.split(key, 8)
    x = jax.random.normal(ks[0], (B, C, H, W), jnp.float32)
    style = jax.random.normal(ks[1], (B, style_dim), jnp.float32)

    # Deterministic synthetic parameters (3 Linear layers, n_mlp=3).
    params = (
        jax.random.normal(ks[2], (style_dim, dim), jnp.float32) * 0.2,    # w1
        jax.random.normal(ks[3], (1, dim), jnp.float32) * 0.1,            # b1
        jax.random.normal(ks[4], (dim, dim), jnp.float32) * 0.2,          # w2
        jax.random.normal(ks[5], (1, dim), jnp.float32) * 0.1,            # b2
        jax.random.normal(ks[6], (dim, 2 * out_dim), jnp.float32) * 0.2,  # w3
        jax.random.normal(ks[7], (1, 2 * out_dim), jnp.float32) * 0.1,    # b3
    )

    out = adain_forward(x, style, params)
    jax.block_until_ready(out)

    ref = adain_reference(x, style, params)
    assert out.shape == (B, C, H, W)
    assert jnp.allclose(out, ref, atol=1e-4, rtol=1e-4), "mismatch vs reference"

    print("KERNEL_OK")
</pallas_src>

<mosaic_0001>
module attributes {stable_mosaic.version = 11 : i64} {
  func.func @kernel(%arg0: i32, %arg1: i32, %arg2: memref<1x4x256xf32, #tpu.memory_space<vmem>>, %arg3: memref<1x4x1xf32, #tpu.memory_space<vmem>>, %arg4: memref<1x4x1xf32, #tpu.memory_space<vmem>>, %arg5: memref<1x4x256xf32, #tpu.memory_space<vmem>>) attributes {dimension_semantics = [#tpu.dimension_semantics<parallel>, #tpu.dimension_semantics<parallel>], iteration_bounds = array<i64: 2, 1>, scalar_prefetch = 0 : i64, scratch_operands = 0 : i64, tpu.core_type = #tpu.core_type<tc>, window_params = [{transform_indices = @transform_0, window_bounds = array<i64: 1, 4, 256>}, {transform_indices = @transform_1, window_bounds = array<i64: 1, 4, 1>}, {transform_indices = @transform_2, window_bounds = array<i64: 1, 4, 1>}, {transform_indices = @transform_3, window_bounds = array<i64: 1, 4, 256>}]} {
    %cst = arith.constant 0.000000e+00 : f32
    %0 = vector.broadcast %cst : f32 to vector<1x4x1xf32>
    %c0_i32 = arith.constant 0 : i32
    %c256_i32 = arith.constant 256 : i32
    %1 = arith.muli %c0_i32, %c256_i32 : i32
    %2 = tpu.assume_multiple %1, 256 : i32
    %c0 = arith.constant 0 : index
    %c0_0 = arith.constant 0 : index
    %3 = arith.index_cast %2 : i32 to index
    %4 = vector.load %arg2[%c0, %c0_0, %3] : memref<1x4x256xf32, #tpu.memory_space<vmem>>, vector<1x4x256xf32>
    %cst_1 = arith.constant dense<0.000000e+00> : vector<1x4xf32>
    %5 = vector.multi_reduction <add>, %4, %cst_1 [2] : vector<1x4x256xf32> to vector<1x4xf32>
    %6 = vector.shape_cast %5 : vector<1x4xf32> to vector<1x4x1xf32>
    %7 = arith.mulf %4, %4 : vector<1x4x256xf32>
    %cst_2 = arith.constant dense<0.000000e+00> : vector<1x4xf32>
    %8 = vector.multi_reduction <add>, %7, %cst_2 [2] : vector<1x4x256xf32> to vector<1x4xf32>
    %9 = vector.shape_cast %8 : vector<1x4xf32> to vector<1x4x1xf32>
    %10 = arith.addf %0, %6 : vector<1x4x1xf32>
    %11 = arith.addf %0, %9 : vector<1x4x1xf32>
    %c1_i32 = arith.constant 1 : i32
    %cst_3 = arith.constant 3.906250e-03 : f32
    %12 = vector.broadcast %cst_3 : f32 to vector<1x4x1xf32>
    %13 = arith.mulf %10, %12 : vector<1x4x1xf32>
    %cst_4 = arith.constant 3.906250e-03 : f32
    %14 = vector.broadcast %cst_4 : f32 to vector<1x4x1xf32>
    %15 = arith.mulf %11, %14 : vector<1x4x1xf32>
    %16 = arith.mulf %13, %13 : vector<1x4x1xf32>
    %17 = arith.subf %15, %16 : vector<1x4x1xf32>
    %cst_5 = arith.constant 0.000000e+00 : f32
    %18 = vector.broadcast %cst_5 : f32 to vector<1x4x1xf32>
    %19 = arith.maximumf %17, %18 : vector<1x4x1xf32>
    %c0_6 = arith.constant 0 : index
    %c0_7 = arith.constant 0 : index
    %c0_8 = arith.constant 0 : index
    %20 = vector.load %arg3[%c0_6, %c0_7, %c0_8] : memref<1x4x1xf32, #tpu.memory_space<vmem>>, vector<1x4x1xf32>
    %cst_9 = arith.constant 9.99999974E-6 : f32
    %21 = vector.broadcast %cst_9 : f32 to vector<1x4x1xf32>
    %22 = arith.addf %19, %21 : vector<1x4x1xf32>
    %23 = math.rsqrt %22 : vector<1x4x1xf32>
    %24 = arith.mulf %20, %23 : vector<1x4x1xf32>
    %c0_10 = arith.constant 0 : index
    %c0_11 = arith.constant 0 : index
    %c0_12 = arith.constant 0 : index
    %25 = vector.load %arg4[%c0_10, %c0_11, %c0_12] : memref<1x4x1xf32, #tpu.memory_space<vmem>>, vector<1x4x1xf32>
    %26 = arith.mulf %13, %24 : vector<1x4x1xf32>
    %27 = arith.subf %25, %26 : vector<1x4x1xf32>
    %c0_i32_13 = arith.constant 0 : i32
    %c256_i32_14 = arith.constant 256 : i32
    %28 = arith.muli %c0_i32_13, %c256_i32_14 : i32
    %29 = tpu.assume_multiple %28, 256 : i32
    %c0_15 = arith.constant 0 : index
    %c0_16 = arith.constant 0 : index
    %30 = arith.index_cast %29 : i32 to index
    %31 = vector.load %arg2[%c0_15, %c0_16, %30] : memref<1x4x256xf32, #tpu.memory_space<vmem>>, vector<1x4x256xf32>
    %32 = vector.broadcast %24 : vector<1x4x1xf32> to vector<1x4x256xf32>
    %33 = arith.mulf %31, %32 : vector<1x4x256xf32>
    %34 = vector.broadcast %27 : vector<1x4x1xf32> to vector<1x4x256xf32>
    %35 = arith.addf %33, %34 : vector<1x4x256xf32>
    %c0_17 = arith.constant 0 : index
    %c0_18 = arith.constant 0 : index
    %36 = arith.index_cast %29 : i32 to index
    %37 = vector.load %arg5[%c0_17, %c0_18, %36] : memref<1x4x256xf32, #tpu.memory_space<vmem>>, vector<1x4x256xf32>
    tpu.vector_store %arg5[%c0_17, %c0_18, %36], %35 {strides = array<i32>} : memref<1x4x256xf32, #tpu.memory_space<vmem>>, vector<1x4x256xf32>,
    %c1_i32_19 = arith.constant 1 : i32
    return
  }
  func.func @transform_0(%arg0: i32, %arg1: i32) -> (i32, i32, i32) {
    %c0_i32 = arith.constant 0 : i32
    %c0_i32_0 = arith.constant 0 : i32
    return %arg0, %arg1, %c0_i32 : i32, i32, i32
  }
  func.func @transform_1(%arg0: i32, %arg1: i32) -> (i32, i32, i32) {
    %c0_i32 = arith.constant 0 : i32
    %c0_i32_0 = arith.constant 0 : i32
    return %arg0, %arg1, %c0_i32 : i32, i32, i32
  }
  func.func @transform_2(%arg0: i32, %arg1: i32) -> (i32, i32, i32) {
    %c0_i32 = arith.constant 0 : i32
    %c0_i32_0 = arith.constant 0 : i32
    return %arg0, %arg1, %c0_i32 : i32, i32, i32
  }
  func.func @transform_3(%arg0: i32, %arg1: i32) -> (i32, i32, i32) {
    %c0_i32 = arith.constant 0 : i32
    %c0_i32_0 = arith.constant 0 : i32
    return %arg0, %arg1, %c0_i32 : i32, i32, i32
  }
}

</mosaic_0001>

<llo_original>
// kernel: tpu_custom_call.1
$region0: #{tpu_custom_call.1}
  #allocation0 [shape = 'u32[]', space=smem, size = 0x4, offset = 0x4, fixed_abs, tag = 'smem constant byte address 0x4 - core index']
  #allocation1 [shape = 'u32[144,128]{1,0:T(1,128)}', space=vmem, size = 0x12000, scoped, tag = 'internal scratch']
  %s0 = inlined_call_operand.vmem [shape: f32[2,4,256], index: 0, kind: input, shape index: {}]
  %s1 = inlined_call_operand.vmem [shape: f32[2,4,1], index: 1, kind: input, shape index: {}]
  %s2 = inlined_call_operand.vmem [shape: f32[2,4,1], index: 2, kind: input, shape index: {}]
  %s3 = inlined_call_operand.hbm [shape: f32[2,4,256], index: 3, kind: output, shape index: {}]
  %s4 = sld [smem:[#allocation0]]
  $region45: #{tpu_custom_call.1} parent=0
    _
  %s6 = ssub.s32 1, %s4
  %s7 = scalar_select 0, %s6, %s4
  $region1: #{tpu_custom_call.1} parent=0
    #allocation2 [shape = 'u8[8192]{0}', space=vmem, size = 0x2000, scoped, tag = 'output window, operand 0']
    #allocation3 [shape = 's32[2]{0}', space=sflag, size = 0x8, scoped, tag = 'scoped memory for tpu_custom_call.1']
    %8 = vsyncpa [#allocation3], 0
    %s9 = scalar_lea.sflag [#allocation3], 1
    %10 = vsyncpa %s9, 0
    loop: start=0, step=1, limit=4
    $region2: #{tpu_custom_call.1} parent=1 // loop_pre_header
      _
    $region3: #{tpu_custom_call.1} parent=1 // loop_header
      %s12 = sphi 0, %s16
      %p13 = scmp.ge.s32.totalorder %s12, 4
      %s19 = sphi 0, %s31
      %s20 = sphi 0, %s27
      %s21 = sphi 0, %s19
      %s22 = sphi 0, %s20
      %s23 = sphi 0, %s21
      %s24 = sphi 0, %s22
      %s36 = sphi 0, %s38
      %s39 = sphi 0, %s36
      %s40 = sphi 0, %s39
      %s56 = sphi 0, %s40
      %s64 = sphi 0, %s66
      %s67 = sphi 0, %s64
      %s68 = sphi 0, %s67
      %s84 = sphi 0, %s68
      %s92 = sphi 0, %s94
      %s95 = sphi 0, %s92
      %s96 = sphi 0, %s95
      %s112 = sphi 0, %s96
      %s120 = sphi 0, %s122
      %s123 = sphi 0, %s120
      %s124 = sphi 0, %s123
      %s140 = sphi 0, %s124
    $region4: #{tpu_custom_call.1} parent=1 // loop_header_branch
      %15 = sbr.rel (%p13) target = $region8
    $region5: #{tpu_custom_call.1} parent=1 // loop_body
      %s17 = ssub.s32 %s12, 1
      %s18 = ssub.s32 %s12, 2
      %s25 = sadd.s32 1, %s20
      %p26 = scmp.ge.s32.totalorder %s25, 1
      %s27 = scalar_select %p26, 0, %s25
      %s28 = sadd.s32 1, %s19
      %s29 = scalar_select %p26, %s28, %s19
      %p30 = scmp.ge.s32.totalorder %s29, 2
      %s31 = scalar_select %p30, 0, %s29
      %s32 = ssub.s32 %s19, %s31
      %s33 = ssub.s32 %s20, %s27
      %s34 = sor.u32 %s32, %s33
      %p35 = scmp.eq.s32.totalorder %s34, 0
      %s37 = sadd.s32 %s36, 1
      %s38 = scalar_select %p35, %s36, %s37
      %p41 = pneg %p35
      %p42 = scmp.eq.s32.totalorder %s12, 1
      %p43 = por %p41, %p42
      %p44 = scmp.ne.s32.totalorder %s36, %s39
      %p45 = scmp.eq.s32.totalorder %s12, 0
      %p46 = por %p44, %p45
      %p47 = scmp.ne.s32.totalorder %s36, %s39
      %p48 = scmp.eq.s32.totalorder %s17, 1
      %p49 = por %p47, %p48
      %p50 = scmp.ne.s32.totalorder %s39, %s40
      %p51 = scmp.eq.s32.totalorder %s17, 0
      %p52 = por %p50, %p51
      %p53 = scmp.ne.s32.totalorder %s39, %s40
      %p54 = scmp.eq.s32.totalorder %s18, 1
      %p55 = por %p53, %p54
      %p57 = scmp.ne.s32.totalorder %s40, %s56
      %p58 = scmp.eq.s32.totalorder %s18, 0
      %p59 = por %p57, %p58
      %s60 = ssub.s32 %s19, %s31
      %s61 = ssub.s32 %s20, %s27
      %s62 = sor.u32 %s60, %s61
      %p63 = scmp.eq.s32.totalorder %s62, 0
      %s65 = sadd.s32 %s64, 1
      %s66 = scalar_select %p63, %s64, %s65
      %p69 = pneg %p63
      %p70 = scmp.eq.s32.totalorder %s12, 1
      %p71 = por %p69, %p70
      %p72 = scmp.ne.s32.totalorder %s64, %s67
      %p73 = scmp.eq.s32.totalorder %s12, 0
      %p74 = por %p72, %p73
      %p75 = scmp.ne.s32.totalorder %s64, %s67
      %p76 = scmp.eq.s32.totalorder %s17, 1
      %p77 = por %p75, %p76
      %p78 = scmp.ne.s32.totalorder %s67, %s68
      %p79 = scmp.eq.s32.totalorder %s17, 0
      %p80 = por %p78, %p79
      %p81 = scmp.ne.s32.totalorder %s67, %s68
      %p82 = scmp.eq.s32.totalorder %s18, 1
      %p83 = por %p81, %p82
      %p85 = scmp.ne.s32.totalorder %s68, %s84
      %p86 = scmp.eq.s32.totalorder %s18, 0
      %p87 = por %p85, %p86
      %s88 = ssub.s32 %s19, %s31
      %s89 = ssub.s32 %s20, %s27
      %s90 = sor.u32 %s88, %s89
      %p91 = scmp.eq.s32.totalorder %s90, 0
      %s93 = sadd.s32 %s92, 1
      %s94 = scalar_select %p91, %s92, %s93
      %p97 = pneg %p91
      %p98 = scmp.eq.s32.totalorder %s12, 1
      %p99 = por %p97, %p98
      %p100 = scmp.ne.s32.totalorder %s92, %s95
      %p101 = scmp.eq.s32.totalorder %s12, 0
      %p102 = por %p100, %p101
      %p103 = scmp.ne.s32.totalorder %s92, %s95
      %p104 = scmp.eq.s32.totalorder %s17, 1
      %p105 = por %p103, %p104
      %p106 = scmp.ne.s32.totalorder %s95, %s96
      %p107 = scmp.eq.s32.totalorder %s17, 0
      %p108 = por %p106, %p107
      %p109 = scmp.ne.s32.totalorder %s95, %s96
      %p110 = scmp.eq.s32.totalorder %s18, 1
      %p111 = por %p109, %p110
      %p113 = scmp.ne.s32.totalorder %s96, %s112
      %p114 = scmp.eq.s32.totalorder %s18, 0
      %p115 = por %p113, %p114
      %s116 = ssub.s32 %s19, %s31
      %s117 = ssub.s32 %s20, %s27
      %s118 = sor.u32 %s116, %s117
      %p119 = scmp.eq.s32.totalorder %s118, 0
      %s121 = sadd.s32 %s120, 1
      %s122 = scalar_select %p119, %s120, %s121
      %p125 = pneg %p119
      %p126 = scmp.eq.s32.totalorder %s12, 1
      %p127 = por %p125, %p126
      %p128 = scmp.ne.s32.totalorder %s120, %s123
      %p129 = scmp.eq.s32.totalorder %s12, 0
      %p130 = por %p128, %p129
      %p131 = scmp.ne.s32.totalorder %s120, %s123
      %p132 = scmp.eq.s32.totalorder %s17, 1
      %p133 = por %p131, %p132
      %p134 = scmp.ne.s32.totalorder %s123, %s124
      %p135 = scmp.eq.s32.totalorder %s17, 0
      %p136 = por %p134, %p135
      %p137 = scmp.ne.s32.totalorder %s123, %s124
      %p138 = scmp.eq.s32.totalorder %s18, 1
      %p139 = por %p137, %p138
      %p141 = scmp.ne.s32.totalorder %s124, %s140
      %p142 = scmp.eq.s32.totalorder %s18, 0
      %p143 = por %p141, %p142
      %p144 = scmp.le.s32.totalorder 1, %s12
      %p145 = scmp.lt.s32.totalorder %s12, 3
      %p146 = pnand %p144, %p145
      %p147 = pneg %p146
      // Predicated region
      $region9: #{tpu_custom_call.1} parent=5 // pred_check
        _
      $region10: #{tpu_custom_call.1} parent=5 // pred_check_branch
        %149 = sbr.rel (%p146) target = $region12
      $region11: #{tpu_custom_call.1} parent=5 // pred_region
        %s150 = ssub.s32 %s12, 1
      $region12: #{tpu_custom_call.1} parent=5 // pred_fallthru
        _
      %p151 = scmp.lt.s32.totalorder %s12, 2
      // Predicated region
      $region13: #{tpu_custom_call.1} parent=5 // pred_check
        %p152 = pneg %p151
      $region14: #{tpu_custom_call.1} parent=5 // pred_check_branch
        %154 = sbr.rel (%p152) target = $region16
      $region15: #{tpu_custom_call.1} parent=5 // pred_region
        // Predicated region
        $region17: #{tpu_custom_call.1} parent=15 // pred_check
          %p155 = pneg %p46
        $region18: #{tpu_custom_call.1} parent=15 // pred_check_branch
          %157 = sbr.rel (%p155) target = $region20
        $region19: #{tpu_custom_call.1} parent=15 // pred_region
          %p158 = scmp.lt.s32.totalorder %s19, 1
          %s159 = scalar_select %p158, %s19, 1
          %p160 = scmp.lt.s32.totalorder %s20, 0
          %s161 = scalar_select %p160, %s20, 0
          %s162 = smul.addr %s161, 2
          %s163 = smul.addr %s159, 2
          %s164 = sadd.s32 %s162, %s163
          %s165 = smul.addr %s164, 4
          %s166 = scalar_lea.vmem %s0, %s165
        $region20: #{tpu_custom_call.1} parent=15 // pred_fallthru
          _
        // Predicated region
        $region21: #{tpu_custom_call.1} parent=15 // pred_check
          %p167 = pneg %p74
        $region22: #{tpu_custom_call.1} parent=15 // pred_check_branch
          %169 = sbr.rel (%p167) target = $region24
        $region23: #{tpu_custom_call.1} parent=15 // pred_region
          %p170 = scmp.lt.s32.totalorder %s19, 1
          %s171 = scalar_select %p170, %s19, 1
          %p172 = scmp.lt.s32.totalorder %s20, 0
          %s173 = scalar_select %p172, %s20, 0
          %s174 = sadd.s32 %s173, %s171
          %s175 = smul.addr %s174, 4
          %s176 = scalar_lea.vmem %s1, %s175
        $region24: #{tpu_custom_call.1} parent=15 // pred_fallthru
          _
        // Predicated region
        $region25: #{tpu_custom_call.1} parent=15 // pred_check
          %p177 = pneg %p102
        $region26: #{tpu_custom_call.1} parent=15 // pred_check_branch
          %179 = sbr.rel (%p177) target = $region28
        $region27: #{tpu_custom_call.1} parent=15 // pred_region
          %p180 = scmp.lt.s32.totalorder %s19, 1
          %s181 = scalar_select %p180, %s19, 1
          %p182 = scmp.lt.s32.totalorder %s20, 0
          %s183 = scalar_select %p182, %s20, 0
          %s184 = sadd.s32 %s183, %s181
          %s185 = smul.addr %s184, 4
          %s186 = scalar_lea.vmem %s2, %s185
        $region28: #{tpu_custom_call.1} parent=15 // pred_fallthru
          _
      $region16: #{tpu_custom_call.1} parent=5 // pred_fallthru
        _
      %p187 = scmp.le.s32.totalorder 1, %s12
      %p188 = scmp.lt.s32.totalorder %s12, 3
      %p189 = pnand %p187, %p188
      %p190 = pneg %p189
      // Predicated region
      $region29: #{tpu_custom_call.1} parent=5 // pred_check
        _
      $region30: #{tpu_custom_call.1} parent=5 // pred_check_branch
        %192 = sbr.rel (%p189) target = $region32
      $region31: #{tpu_custom_call.1} parent=5 // pred_region
        %s193 = ssub.s32 %s12, 1
        %p194 = scmp.lt.s32.totalorder %s21, 1
        %s195 = scalar_select %p194, %s21, 1
        %p196 = scmp.lt.s32.totalorder %s22, 0
        %s197 = scalar_select %p196, %s22, 0
        %s198 = smul.addr %s197, 2
        %s199 = smul.addr %s195, 2
        %s200 = sadd.s32 %s198, %s199
        %s201 = smul.addr %s200, 4
        %s202 = scalar_lea.vmem %s0, %s201
        %p203 = pneg %p52
        %p204 = pneg %p49
        %p205 = scmp.lt.s32.totalorder %s21, 1
        %s206 = scalar_select %p205, %s21, 1
        %p207 = scmp.lt.s32.totalorder %s22, 0
        %s208 = scalar_select %p207, %s22, 0
        %s209 = sadd.s32 %s208, %s206
        %s210 = smul.addr %s209, 4
        %s211 = scalar_lea.vmem %s1, %s210
        %p212 = pneg %p80
        %p213 = pneg %p77
        %p214 = scmp.lt.s32.totalorder %s21, 1
        %s215 = scalar_select %p214, %s21, 1
        %p216 = scmp.lt.s32.totalorder %s22, 0
        %s217 = scalar_select %p216, %s22, 0
        %s218 = sadd.s32 %s217, %s215
        %s219 = smul.addr %s218, 4
        %s220 = scalar_lea.vmem %s2, %s219
        %p221 = pneg %p108
        %p222 = pneg %p105
        %p223 = pneg %p136
        %p224 = pneg %p133
        %s225 = sand.u32 %s123, 1
        %s226 = scalar_lea.sflag [#allocation3], %s225
        %s227 = sand.u32 %s123, 1
        %s228 = smul.addr %s227, 8
        %s229 = scalar_lea.vmem [#allocation2], %s228
        %p230 = scmp.lt.s32.totalorder %s21, 1
        %s231 = scalar_select %p230, %s21, 1
        %p232 = scmp.lt.s32.totalorder %s22, 0
        %s233 = scalar_select %p232, %s22, 0
        %s234 = smul.addr %s233, 2
        %s235 = smul.addr %s231, 2
        %s236 = sadd.s32 %s234, %s235
        %s237 = smul.addr %s236, 4
        %s238 = scalar_lea.vmem %s0, %s237
        %p239 = scmp.lt.s32.totalorder %s21, 1
        %s240 = scalar_select %p239, %s21, 1
        %p241 = scmp.lt.s32.totalorder %s22, 0
        %s242 = scalar_select %p241, %s22, 0
        %s243 = sadd.s32 %s242, %s240
        %s244 = smul.addr %s243, 4
        %s245 = scalar_lea.vmem %s1, %s244
        %p246 = scmp.lt.s32.totalorder %s21, 1
        %s247 = scalar_select %p246, %s21, 1
        %p248 = scmp.lt.s32.totalorder %s22, 0
        %s249 = scalar_select %p248, %s22, 0
        %s250 = sadd.s32 %s249, %s247
        %s251 = smul.addr %s250, 4
        %s252 = scalar_lea.vmem %s2, %s251
        %v253 = vld [vmem:[%s238] sm:$0xff]
        %v255 = vcombine.high %v253, %v253
        %vm257 = vcmask 1043456
        %v258 = vsel %vm257, %v253, 0.0
        %v259 = vsel %vm257, %v255, 0.0
        %v260 = vadd.f32 %v258, %v259
        %261 = vadd.xlane.f32.xlu0 %v260
        %v262 = vpop.xlane.xlu0 %261
        %v263 = vmul.f32 %v253, %v253
        %v265 = vcombine.high %v263, %v263
        %v267 = vsel %vm257, %v263, 0.0
        %v268 = vsel %vm257, %v265, 0.0
        %v269 = vadd.f32 %v267, %v268
        %270 = vadd.xlane.f32.xlu0 %v269
        %v271 = vpop.xlane.xlu0 %270
        %v272 = vadd.f32 %v262, 0.0
        %v273 = vadd.f32 %v271, 0.0
        %v274 = vmul.f32 %v272, 0.00390625
        %v275 = vmul.f32 %v273, 0.00390625
        %v276 = vmul.f32 %v274, %v274
        %v277 = vsub.f32 %v275, %v276
        %v278 = vmax.f32 %v277, 0.0
        %v279 = vld [vmem:[%s245] sm:$0xf]
        %v280 = vadd.f32 %v278, 1e-05
        %v281 = vrsqrt.pop %v280
        %v282 = vmul.f32 %v279, %v281
        %v283 = vld [vmem:[%s252] sm:$0xf]
        %v284 = vmul.f32 %v274, %v282
        %v285 = vsub.f32 %v283, %v284
        %287 = vset.pattern.permute.xlu0 0
        %288 = vperm.xlu0 %287, %v282
        %v289 = vpop.permute.xlu0 %288
        %v291 = vunpack.c.l.s4 839922192
        %v292 = vunpack.c.0.s8 %v291
        %v293 = vlaneseq
        %v294 = vshrl.u32 %v293, 7
        %v295 = vsub.s32 %v292, %v294
        %v296 = vrot.slane %v289, %v295
        %v298 = vmul.f32 %v253, %v296
        %300 = vset.pattern.permute.xlu0 0
        %301 = vperm.xlu0 %300, %v285
        %v302 = vpop.permute.xlu0 %301
        %v304 = vunpack.c.l.s4 839922192
        %v305 = vunpack.c.0.s8 %v304
        %v306 = vlaneseq
        %v307 = vshrl.u32 %v306, 7
        %v308 = vsub.s32 %v305, %v307
        %v309 = vrot.slane %v302, %v308
        %v311 = vadd.f32 %v298, %v309
        %312 = vst [vmem:[%s229] sm:$0xff] %v311
        %s313 = sand.u32 %s123, 1
        %s314 = scalar_lea.sflag [#allocation3], %s313
        %s315 = sand.u32 %s123, 1
        %s316 = smul.addr %s315, 8
        %s317 = scalar_lea.vmem [#allocation2], %s316
        // Predicated region
        $region33: #{tpu_custom_call.1} parent=31 // pred_check
          %p318 = pneg %p133
        $region34: #{tpu_custom_call.1} parent=31 // pred_check_branch
          %320 = sbr.rel (%p318) target = $region36
        $region35: #{tpu_custom_call.1} parent=31 // pred_region
          %s322 = ssub.s32 128, 128
          %323 = vsyncadd %s314, %s322
          %s324 = smul.addr %s22, 2
          %s325 = smul.addr %s21, 2
          %s326 = sadd.s32 %s324, %s325
          %s327 = smul.addr %s326, 64
          %s328 = scalar_lea.hbm %s3, %s327
          %s330 = sshll.u32 %s317, 4
          %s331 = int_to_ptr.vmem [resolvable:$true] %s330
          %333 = dma.vmem_to_hbm [thread:$0]  %s331, 128, %s328, %s314
        $region36: #{tpu_custom_call.1} parent=31 // pred_fallthru
          _
      $region32: #{tpu_custom_call.1} parent=5 // pred_fallthru
        _
      %p334 = scmp.le.s32.totalorder 2, %s12
      // Predicated region
      $region37: #{tpu_custom_call.1} parent=5 // pred_check
        %p335 = pneg %p334
      $region38: #{tpu_custom_call.1} parent=5 // pred_check_branch
        %337 = sbr.rel (%p335) target = $region40
      $region39: #{tpu_custom_call.1} parent=5 // pred_region
        %s338 = ssub.s32 %s12, 2
        // Predicated region
        $region41: #{tpu_custom_call.1} parent=39 // pred_check
          %p339 = pneg %p139
        $region42: #{tpu_custom_call.1} parent=39 // pred_check_branch
          %341 = sbr.rel (%p339) target = $region44
        $region43: #{tpu_custom_call.1} parent=39 // pred_region
          %s342 = sand.u32 %s124, 1
          %s343 = scalar_lea.sflag [#allocation3], %s342
          %s344 = sand.u32 %s124, 1
          %s345 = smul.addr %s344, 8
          %s346 = scalar_lea.vmem [#allocation2], %s345
          %347 = dma.done %s343, 128
        $region44: #{tpu_custom_call.1} parent=39 // pred_fallthru
          _
      $region40: #{tpu_custom_call.1} parent=5 // pred_fallthru
        _
    $region6: #{tpu_custom_call.1} parent=1 // loop_footer
      %s16 = sadd.s32 1, %s12
    $region7: #{tpu_custom_call.1} parent=1 // loop_footer_branch
      %11 = sbr.rel target = $region3
    $region8: #{tpu_custom_call.1} parent=1 // loop_exit
      _
    %348 = vsyncpa [#allocation3], 1
    %s349 = scalar_lea.sflag [#allocation3], 1
    %350 = vsyncpa %s349, 1

</llo_original>
